<compile_context>
chip_gen: v7x
topology: tpu7x:2x2x1
jax: 0.10.0
libtpu: 0.0.40
codegen_flags: <defaults>
</compile_context>

<pallas_src>
import jax
import jax.numpy as jnp
from jax.experimental import pallas as pl
from jax.experimental.pallas import tpu as pltpu


def _copy_kernel(x_ref, o_ref):
    # Straight tile copy: no extra VPU work (keeps v5e's single vst slot from
    # ever becoming the bottleneck); the kernel is purely HBM-bandwidth bound.
    o_ref[...] = x_ref[...]


def _flat_2d_layout(total_elems):
    """Pick (rows, lane) with lane a large multiple of 128 dividing total."""
    for lane in (4096, 2048, 1024, 512, 256, 128):
        if total_elems % lane == 0:
            return total_elems // lane, lane
    return None


def _pick_row_tile(rows, lane, itemsize, target_bytes=2 << 20):
    """Row-tile size giving ~target_bytes per tile, sublane-aligned."""
    sub = max(8, 32 // itemsize)              # 8 for f32, 16 for bf16, 32 for i8
    tr = max(1, target_bytes // (lane * itemsize))
    if tr >= rows:
        return rows                           # one tile covers everything
    tr = (tr // sub) * sub                    # sublane-aligned partial tiling
    if tr < sub:
        tr = min(sub, rows)
    return tr


def reshape_anchors_class_score(x, num_anchors=9, num_classes=80):
    """x: (B, C, W, H) with C == num_classes * num_anchors.

    Returns (B, num_classes, num_anchors, W, H), matching the PyTorch
    ReshapeAnchorsClassScore.forward.
    """
    batch_size, channels, width, height = x.shape
    assert channels == num_classes * num_anchors, (
        f"channels ({channels}) must equal num_classes*num_anchors "
        f"({num_classes}*{num_anchors})"
    )

    out_shape = (batch_size, num_classes, num_anchors, width, height)
    itemsize = jnp.dtype(x.dtype).itemsize
    total = batch_size * channels * width * height

    layout = _flat_2d_layout(total)
    if layout is None:
        # Fallback: fuse (W, H) into the lane axis. A full-extent last block
        # dim satisfies the (8, 128) rule even when W*H % 128 != 0.
        rows, lane = batch_size * channels, width * height
    else:
        rows, lane = layout

    tr = _pick_row_tile(rows, lane, itemsize)
    grid = (pl.cdiv(rows, tr),)

    # Free, metadata-only reshape: the contiguous byte order is unchanged, so
    # a flat copy of this 2-D view is exactly the PyTorch .view semantics.
    x2d = jnp.reshape(x, (rows, lane))

    out2d = pl.pallas_call(
        _copy_kernel,
        out_shape=jax.ShapeDtypeStruct((rows, lane), x.dtype),
        grid=grid,
        in_specs=[pl.BlockSpec((tr, lane), lambda i: (i, 0))],
        out_specs=pl.BlockSpec((tr, lane), lambda i: (i, 0)),
        compiler_params=pltpu.CompilerParams(
            dimension_semantics=("parallel",),
        ),
    )(x2d)

    # Free, metadata-only reshape back to the module's output shape.
    return jnp.reshape(out2d, out_shape)


if __name__ == "__main__":
    # Small, consistent shapes: C = num_classes * num_anchors = 4 * 3 = 12.
    num_anchors = 3
    num_classes = 4
    batch_size, width, height = 2, 16, 16
    channels = num_classes * num_anchors

    key = jax.random.PRNGKey(0)
    x = jax.random.normal(
        key, (batch_size, channels, width, height), dtype=jnp.float32
    )

    out = reshape_anchors_class_score(
        x, num_anchors=num_anchors, num_classes=num_classes
    )
    out = jax.block_until_ready(out)

    # Reference: the PyTorch .view is a row-major reshape of a contiguous tensor.
    ref = jnp.reshape(x, (batch_size, num_classes, num_anchors, width, height))
    assert out.shape == (batch_size, num_classes, num_anchors, width, height)
    assert out.dtype == x.dtype
    assert jnp.array_equal(out, ref)

    print("KERNEL_OK")
</pallas_src>

<mosaic_0001>
module attributes {stable_mosaic.version = 11 : i64} {
  func.func @_copy_kernel(%arg0: i32, %arg1: memref<3x2048xf32, #tpu.memory_space<vmem>>, %arg2: memref<3x2048xf32, #tpu.memory_space<vmem>>) attributes {dimension_semantics = [#tpu.dimension_semantics<parallel>], iteration_bounds = array<i64: 1>, scalar_prefetch = 0 : i64, scratch_operands = 0 : i64, tpu.core_type = #tpu.core_type<tc>, window_params = [{transform_indices = @transform_0, window_bounds = array<i64: 3, 2048>}, {transform_indices = @transform_1, window_bounds = array<i64: 3, 2048>}]} {
    %c0 = arith.constant 0 : index
    %c0_0 = arith.constant 0 : index
    %0 = vector.load %arg1[%c0, %c0_0] : memref<3x2048xf32, #tpu.memory_space<vmem>>, vector<3x2048xf32>
    %c0_1 = arith.constant 0 : index
    %c0_2 = arith.constant 0 : index
    %1 = vector.load %arg2[%c0_1, %c0_2] : memref<3x2048xf32, #tpu.memory_space<vmem>>, vector<3x2048xf32>
    tpu.vector_store %arg2[%c0_1, %c0_2], %0 {strides = array<i32>} : memref<3x2048xf32, #tpu.memory_space<vmem>>, vector<3x2048xf32>,
    return
  }
  func.func @transform_0(%arg0: i32) -> (i32, i32) {
    %c0_i32 = arith.constant 0 : i32
    %c0_i32_0 = arith.constant 0 : i32
    return %arg0, %c0_i32 : i32, i32
  }
  func.func @transform_1(%arg0: i32) -> (i32, i32) {
    %c0_i32 = arith.constant 0 : i32
    %c0_i32_0 = arith.constant 0 : i32
    return %arg0, %c0_i32 : i32, i32
  }
}

</mosaic_0001>

<llo_original>
// kernel: tpu_custom_call.1
$region0: #{tpu_custom_call.1}
  #allocation0 [shape = 'u32[]', space=smem, size = 0x4, offset = 0x4, fixed_abs, tag = 'smem constant byte address 0x4 - core index']
  #allocation1 [shape = 'u32[144,128]{1,0:T(1,128)}', space=vmem, size = 0x12000, scoped, tag = 'internal scratch']
  %s0 = inlined_call_operand.hbm [shape: f32[3,2048], index: 0, kind: input, shape index: {}]
  %s1 = inlined_call_operand.hbm [shape: f32[3,2048], index: 1, kind: output, shape index: {}]
  %s2 = sld [smem:[#allocation0]]
  $region18: #{tpu_custom_call.1} parent=0
    _
  %s4 = ssub.s32 1, %s2
  %s5 = scalar_select 0, %s4, %s2
  $region1: #{tpu_custom_call.1} parent=0
    #allocation2 [shape = 'u8[32768]{0}', space=vmem, size = 0x8000, scoped, tag = 'input window, operand 0, single buffered']
    #allocation3 [shape = 's32[1]{0}', space=sflag, size = 0x4, scoped, tag = 'scoped memory for tpu_custom_call.1']
    #allocation4 [shape = 's32[1]{0}', space=sflag, size = 0x4, scoped, tag = 'scoped memory for tpu_custom_call.1']
    #allocation5 [shape = 'u8[32768]{0}', space=vmem, size = 0x8000, scoped, tag = 'output window, operand 0, single buffered']
    %6 = vsyncpa [#allocation3], 0
    %7 = vsyncpa [#allocation4], 0
    // Predicated region
    $region2: #{tpu_custom_call.1} parent=1 // pred_check
      _
    $region3: #{tpu_custom_call.1} parent=1 // pred_check_branch
      %9 = sbr.rel (0) target = $region5
    $region4: #{tpu_custom_call.1} parent=1 // pred_region
      %s11 = ssub.s32 1024, 1024
      %12 = vsyncadd [#allocation3], %s11
      %s14 = sshll.u32 [#allocation2], 4
      %s15 = int_to_ptr.vmem [resolvable:$true] %s14
      %17 = dma.hbm_to_vmem [thread:$0]  %s0, 1024, %s15, [#allocation3]
    $region5: #{tpu_custom_call.1} parent=1 // pred_fallthru
      _
    // Predicated region
    $region6: #{tpu_custom_call.1} parent=1 // pred_check
      _
    $region7: #{tpu_custom_call.1} parent=1 // pred_check_branch
      %19 = sbr.rel (0) target = $region9
    $region8: #{tpu_custom_call.1} parent=1 // pred_region
      %20 = dma.done [#allocation3], 1024
    $region9: #{tpu_custom_call.1} parent=1 // pred_fallthru
      _
    %v21 = vld [vmem:[#allocation2] sm:$0x77]
    %v22 = vld [vmem:[#allocation2 + $0x8] sm:$0x77]
    %v23 = vld [vmem:[#allocation2 + $0x10] sm:$0x77]
    %v24 = vld [vmem:[#allocation2 + $0x18] sm:$0x77]
    %v25 = vld [vmem:[#allocation2 + $0x20] sm:$0x77]
    %v26 = vld [vmem:[#allocation2 + $0x28] sm:$0x77]
    %v27 = vld [vmem:[#allocation2 + $0x30] sm:$0x77]
    %v28 = vld [vmem:[#allocation2 + $0x38] sm:$0x77]
    %29 = vst [vmem:[#allocation5] sm:$0x77] %v21
    %30 = vst [vmem:[#allocation5 + $0x8] sm:$0x77] %v22
    %31 = vst [vmem:[#allocation5 + $0x10] sm:$0x77] %v23
    %32 = vst [vmem:[#allocation5 + $0x18] sm:$0x77] %v24
    %33 = vst [vmem:[#allocation5 + $0x20] sm:$0x77] %v25
    %34 = vst [vmem:[#allocation5 + $0x28] sm:$0x77] %v26
    %35 = vst [vmem:[#allocation5 + $0x30] sm:$0x77] %v27
    %36 = vst [vmem:[#allocation5 + $0x38] sm:$0x77] %v28
    // Predicated region
    $region10: #{tpu_custom_call.1} parent=1 // pred_check
      _
    $region11: #{tpu_custom_call.1} parent=1 // pred_check_branch
      %38 = sbr.rel (0) target = $region13
    $region12: #{tpu_custom_call.1} parent=1 // pred_region
      %s40 = ssub.s32 1024, 1024
      %41 = vsyncadd [#allocation4], %s40
      %s43 = sshll.u32 [#allocation5], 4
      %s44 = int_to_ptr.vmem [resolvable:$true] %s43
      %46 = dma.vmem_to_hbm [thread:$0]  %s44, 1024, %s1, [#allocation4]
    $region13: #{tpu_custom_call.1} parent=1 // pred_fallthru
      _
    // Predicated region
    $region14: #{tpu_custom_call.1} parent=1 // pred_check
      _
    $region15: #{tpu_custom_call.1} parent=1 // pred_check_branch
      %48 = sbr.rel (0) target = $region17
    $region16: #{tpu_custom_call.1} parent=1 // pred_region
      %49 = dma.done [#allocation4], 1024
    $region17: #{tpu_custom_call.1} parent=1 // pred_fallthru
      _
    %50 = vsyncpa [#allocation3], 1
    %51 = vsyncpa [#allocation4], 1

</llo_original>
